<compile_context>
chip_gen: v7x
topology: tpu7x:2x2x1
jax: 0.10.0
libtpu: 0.0.40
codegen_flags: <defaults>
</compile_context>

<pallas_src>
import functools

import jax
import jax.numpy as jnp
import numpy as np
from jax.experimental import pallas as pl
from jax.experimental.pallas import tpu as pltpu

POSITIVE_LABEL = 1.0
NEGATIVE_LABEL = -1.0
EPS = 1e-4

R_MAX = 256        # 128-row groups per block -> up to 32768 rows per grid step
ACC_ROWS = 16      # sublane-padded accumulator rows (11 used)

# accumulator row layout
_S_POS, _S_NEG_EPS, _S_NEG_NOEPS = 0, 1, 2
_S_REG0 = 3  # .. 3,4,5,6
_N_POS, _N_NEG, _POS_CORRECT, _NEG_CORRECT = 7, 8, 9, 10


def _focal_kernel(out_ref, lab_ref, acc_ref):
    # out_ref / lab_ref: (5, R, 128) f32 tiles (channel-major, lane dense).
    # acc_ref: (1, ACC_ROWS, 128) f32, resident across the "arbitrary" axis.
    @pl.when(pl.program_id(1) == 0)
    def _():
        acc_ref[...] = jnp.zeros_like(acc_ref)

    cls = lab_ref[0]       # (R, 128)
    logits = out_ref[0]    # (R, 128)

    pos_m = (cls == POSITIVE_LABEL).astype(jnp.float32)
    neg_m = (cls == NEGATIVE_LABEL).astype(jnp.float32)

    p = jax.nn.sigmoid(logits)
    one_m_p = 1.0 - p

    # focal terms (gamma == 2; -alpha / -(1-alpha) factors live in the JAX
    # epilogue).  The no-eps variant is only consumed by the "no positives"
    # branch; guard non-negative lanes so a saturated sigmoid elsewhere can't
    # poison the sum with -inf * 0.
    pos_term = pos_m * ((one_m_p * one_m_p) * jnp.log(p + EPS))
    neg_term_eps = neg_m * ((p * p) * jnp.log(one_m_p + EPS))
    neg_term_noeps = neg_m * ((p * p) *
                              jnp.log(jnp.where(neg_m > 0.5, one_m_p, 1.0)))

    def srow(x):  # sublane-only reduction -> (1, 128) lane-wise partials
        return jnp.sum(x, axis=0, keepdims=True)

    rows = [srow(pos_term), srow(neg_term_eps), srow(neg_term_noeps)]

    # SmoothL1 (beta = 1) partial sums for the 4 regression targets over
    # positive rows only.
    for k in range(1, 5):
        d = out_ref[k] - lab_ref[k]
        ad = jnp.abs(d)
        sl1 = jnp.where(ad < 1.0, 0.5 * d * d, ad - 0.5)
        rows.append(srow(pos_m * sl1))

    rows.append(srow(pos_m))                                   # n_pos
    rows.append(srow(neg_m))                                   # n_neg
    rows.append(srow(pos_m * (p >= 0.7).astype(jnp.float32)))  # pos_correct
    rows.append(srow(neg_m * (p < 0.3).astype(jnp.float32)))   # neg_correct

    # Scatter the 11 lane-wise partial rows into distinct sublanes of the
    # (16, 128) accumulator (cheap VPU selects on 2 vregs).  The expensive
    # cross-lane reduction happens exactly once, in the JAX epilogue.
    sub = jax.lax.broadcasted_iota(jnp.int32, (ACC_ROWS, 128), 0)
    upd = jnp.zeros((ACC_ROWS, 128), jnp.float32)
    for idx, row in enumerate(rows):
        upd = upd + jnp.where(sub == idx, row, 0.0)
    acc_ref[...] = acc_ref[...] + upd[None]


def _run_focal_reductions(out_r, lab_r, r_blk):
    """out_r, lab_r: (5, Gp, 128) f32 with Gp % (2*r_blk) == 0.

    Returns a (2, ACC_ROWS, 128) f32 accumulator (one slab per TensorCore).
    """
    _, gp, _ = out_r.shape
    nb_per_core = gp // (2 * r_blk)

    def in_map(c, i):
        return (0, c * nb_per_core + i, 0)

    def out_map(c, i):
        return (c, 0, 0)

    return pl.pallas_call(
        _focal_kernel,
        out_shape=jax.ShapeDtypeStruct((2, ACC_ROWS, 128), jnp.float32),
        grid_spec=pltpu.PrefetchScalarGridSpec(
            num_scalar_prefetch=0,
            grid=(2, nb_per_core),
            in_specs=[
                pl.BlockSpec((5, r_blk, 128), in_map),
                pl.BlockSpec((5, r_blk, 128), in_map),
            ],
            out_specs=pl.BlockSpec((1, ACC_ROWS, 128), out_map),
        ),
        compiler_params=pltpu.CompilerParams(
            dimension_semantics=("parallel", "arbitrary")),
    )(out_r, lab_r)


@functools.partial(jax.jit, static_argnames=("size_average", "block_groups"))
def focal_loss_forward(output, labels, alpha, size_average=True,
                       block_groups=None):
    """Pallas-backed FocalLoss.forward (num_hard_neg_per_patch == 0, gamma == 2).

    output, labels: any shape with trailing total size divisible by 5
    (here (B, N, 5)).  Returns
    [loss, r_z, r_h, r_w, r_d, pos_correct, pos_total, neg_correct, neg_total].
    """
    # TODO(synk): hard_mining (top-k over a dynamically-sized negative subset)
    # has no static-shape Pallas equivalent; num_hard_neg_per_patch=0 path only.
    out_flat = output.reshape(-1, 5).astype(jnp.float32)
    lab_flat = labels.reshape(-1, 5).astype(jnp.float32)
    m = out_flat.shape[0]

    # Pick the block size: r_blk 128-row groups per grid step per core,
    # a multiple of 8 (sublane tile) up to R_MAX.
    g = -(-m // 128)                       # number of 128-row groups needed
    if block_groups is None:
        half = (g + 1) // 2
        r_blk = min(R_MAX, max(8, ((half + 7) // 8) * 8))
    else:
        r_blk = int(block_groups)
    gp = ((g + 2 * r_blk - 1) // (2 * r_blk)) * (2 * r_blk)
    mp = gp * 128

    # Pad with class label 0 (neither +1 nor -1) so padded rows are fully
    # masked, then relayout once to channel-major (5, Gp, 128) so the long M
    # axis is lane/sublane dense inside the kernel.
    # TODO(synk): this transpose is one extra HBM pass over both arrays; a
    # producer that already emits channel-major activations would make the
    # kernel a true single-pass reduction.
    pad = mp - m
    out_p = jnp.pad(out_flat, ((0, pad), (0, 0)))
    lab_p = jnp.pad(lab_flat, ((0, pad), (0, 0)))
    out_r = jnp.transpose(out_p, (1, 0)).reshape(5, gp, 128)
    lab_r = jnp.transpose(lab_p, (1, 0)).reshape(5, gp, 128)

    acc = _run_focal_reductions(out_r, lab_r, r_blk)       # (2, 16, 128)

    totals = jnp.sum(acc, axis=(0, 2))                     # (16,)
    s_pos = totals[_S_POS]
    s_neg_eps = totals[_S_NEG_EPS]
    s_neg_noeps = totals[_S_NEG_NOEPS]
    s_reg = totals[_S_REG0:_S_REG0 + 4]

    # Counts: per-lane f32 partials are integer-exact (< 2^24 per lane for any
    # realistic M); do the final reduction in int32 for exactness.
    counts = jnp.sum(acc[:, _N_POS:_N_POS + 4, :].astype(jnp.int32),
                     axis=(0, 2))                          # (4,)
    n_pos_i, n_neg_i = counts[0], counts[1]
    pos_correct_i, neg_correct_i = counts[2], counts[3]
    n_pos = n_pos_i.astype(jnp.float32)

    alpha = alpha.reshape(())
    has_pos = n_pos_i > 0
    safe_npos = jnp.maximum(n_pos, 1.0)

    pos_loss_sum = -alpha * s_pos
    neg_loss_sum_eps = -(1.0 - alpha) * s_neg_eps
    # Guard: when positives exist, s_neg_noeps may be -inf (saturated negative
    # prob); zero it before scaling so 0 * inf can't become NaN in the branch
    # that jnp.where ultimately discards.
    s_neg_noeps_safe = jnp.where(has_pos, 0.0, s_neg_noeps)
    neg_loss_sum_noeps = -(1.0 - alpha) * s_neg_noeps_safe

    if size_average:
        classify_with_pos = (pos_loss_sum + neg_loss_sum_eps) / safe_npos
    else:
        classify_with_pos = pos_loss_sum + neg_loss_sum_eps
    classify_loss = jnp.where(has_pos, classify_with_pos, neg_loss_sum_noeps)

    regress_losses = jnp.where(has_pos, s_reg / safe_npos, jnp.zeros(4))

    loss = classify_loss + jnp.sum(regress_losses)

    pos_correct_o = jnp.where(has_pos, pos_correct_i, 0)
    pos_total_o = jnp.where(has_pos, n_pos_i, 0)

    return [loss,
            regress_losses[0], regress_losses[1],
            regress_losses[2], regress_losses[3],
            pos_correct_o, pos_total_o,
            neg_correct_i, n_neg_i]


def _numpy_reference(output, labels, alpha, gamma=2, size_average=True):
    o = np.asarray(output, np.float64).reshape(-1, 5)
    l = np.asarray(labels, np.float64).reshape(-1, 5)
    alpha = float(np.asarray(alpha).reshape(()))
    sig = lambda x: 1.0 / (1.0 + np.exp(-x))

    pos_m = l[:, 0] == POSITIVE_LABEL
    neg_m = l[:, 0] == NEGATIVE_LABEL
    pos_o, pos_l = o[pos_m], l[pos_m]
    neg_logits = o[neg_m][:, 0]
    neg_prob = sig(neg_logits)

    def smooth_l1(a, b):
        d = a - b
        ad = np.abs(d)
        return np.mean(np.where(ad < 1.0, 0.5 * d * d, ad - 0.5)) if len(d) else 0.0

    if len(pos_o) > 0:
        pos_prob = sig(pos_o[:, 0])
        regs = [smooth_l1(pos_o[:, k], pos_l[:, k]) for k in range(1, 5)]
        pos_loss = -alpha * (1 - pos_prob) ** gamma * np.log(pos_prob + EPS)
        neg_loss = -(1 - alpha) * neg_prob ** gamma * np.log(1 - neg_prob + EPS)
        if size_average:
            classify = (pos_loss.sum() + neg_loss.sum()) / len(pos_prob)
        else:
            classify = pos_loss.sum() + neg_loss.sum()
        pos_correct = int((pos_prob >= 0.7).sum())
        pos_total = len(pos_prob)
    else:
        regs = [0.0, 0.0, 0.0, 0.0]
        neg_loss = -(1 - alpha) * neg_prob ** gamma * np.log(1 - neg_prob)
        classify = neg_loss.sum()
        pos_correct, pos_total = 0, 0
    loss = classify + sum(regs)
    neg_correct = int((neg_prob < 0.3).sum())
    neg_total = len(neg_prob)
    return [loss] + regs + [pos_correct, pos_total, neg_correct, neg_total]


def _make_inputs(key, b, n, allow_pos=True):
    k1, k2, k3 = jax.random.split(key, 3)
    output = jax.random.normal(k1, (b, n, 5), dtype=jnp.float32)
    cls_choice = jax.random.randint(k2, (b, n), 0, 10)
    if allow_pos:
        cls = jnp.where(cls_choice < 2, POSITIVE_LABEL,
                        jnp.where(cls_choice < 8, NEGATIVE_LABEL, 0.0))
    else:
        cls = jnp.where(cls_choice < 8, NEGATIVE_LABEL, 0.0)
    cls = cls.astype(jnp.float32)
    regress_targets = jax.random.normal(k3, (b, n, 4), dtype=jnp.float32)
    labels = jnp.concatenate([cls[..., None], regress_targets], axis=-1)
    return output, labels


def _check(result, ref):
    np.testing.assert_allclose(
        np.array([float(result[i]) for i in range(5)]),
        np.array(ref[:5], np.float64), rtol=1e-4, atol=1e-5)
    assert int(result[5]) == ref[5] and int(result[6]) == ref[6]
    assert int(result[7]) == ref[7] and int(result[8]) == ref[8]


if __name__ == "__main__":
    key = jax.random.PRNGKey(0)
    k_a, k_b, k_c = jax.random.split(key, 3)

    # Deterministic parameters (per __init__): alpha explicitly set, gamma=2.
    alpha = jnp.ones((1,), jnp.float32) * 0.25

    # Test 1: small mixed batch (exercises padding + masking), default tiling.
    out1, lab1 = _make_inputs(k_a, 2, 200)
    res1 = jax.block_until_ready(focal_loss_forward(out1, lab1, alpha))
    _check(res1, _numpy_reference(out1, lab1, alpha))

    # Test 2: larger batch with a forced small block size so the grid has
    # multiple accumulation steps per core (grid = (2, >1)).
    out2, lab2 = _make_inputs(k_b, 2, 1200)
    res2 = jax.block_until_ready(
        focal_loss_forward(out2, lab2, alpha, block_groups=8))
    _check(res2, _numpy_reference(out2, lab2, alpha))

    # Test 3: no positive anchors at all (exercises the no-positives branch).
    out3, lab3 = _make_inputs(k_c, 1, 100, allow_pos=False)
    res3 = jax.block_until_ready(focal_loss_forward(out3, lab3, alpha))
    _check(res3, _numpy_reference(out3, lab3, alpha))

    print("KERNEL_OK")
</pallas_src>

<mosaic_0001>
module attributes {stable_mosaic.version = 11 : i64} {
  func.func @_focal_kernel(%arg0: i32, %arg1: i32, %arg2: memref<5x8x128xf32, #tpu.memory_space<vmem>>, %arg3: memref<5x8x128xf32, #tpu.memory_space<vmem>>, %arg4: memref<1x16x128xf32, #tpu.memory_space<vmem>>) attributes {dimension_semantics = [#tpu.dimension_semantics<parallel>, #tpu.dimension_semantics<arbitrary>], iteration_bounds = array<i64: 2, 1>, scalar_prefetch = 0 : i64, scratch_operands = 0 : i64, tpu.core_type = #tpu.core_type<tc>, window_params = [{transform_indices = @transform_0, window_bounds = array<i64: 5, 8, 128>}, {transform_indices = @transform_1, window_bounds = array<i64: 5, 8, 128>}, {transform_indices = @transform_2, window_bounds = array<i64: 1, 16, 128>}]} {
    %c0_i32 = arith.constant 0 : i32
    %0 = arith.cmpi eq, %arg1, %c0_i32 : i32
    %1 = arith.extui %0 : i1 to i32
    %c0_i32_0 = arith.constant 0 : i32
    %2 = arith.cmpi ne, %1, %c0_i32_0 : i32
    scf.if %2 {
      %cst_77 = arith.constant 0.000000e+00 : f32
      %217 = vector.broadcast %cst_77 : f32 to vector<1x16x128xf32>
      %c0_78 = arith.constant 0 : index
      %c0_79 = arith.constant 0 : index
      %c0_80 = arith.constant 0 : index
      %218 = vector.load %arg4[%c0_78, %c0_79, %c0_80] : memref<1x16x128xf32, #tpu.memory_space<vmem>>, vector<1x16x128xf32>
      tpu.vector_store %arg4[%c0_78, %c0_79, %c0_80], %217 {strides = array<i32>} : memref<1x16x128xf32, #tpu.memory_space<vmem>>, vector<1x16x128xf32>,
    } else {
    }
    %c0 = arith.constant 0 : index
    %c0_1 = arith.constant 0 : index
    %c0_2 = arith.constant 0 : index
    %3 = vector.load %arg3[%c0, %c0_1, %c0_2] : memref<5x8x128xf32, #tpu.memory_space<vmem>>, vector<1x8x128xf32>
    %4 = vector.shape_cast %3 : vector<1x8x128xf32> to vector<8x128xf32>
    %c0_3 = arith.constant 0 : index
    %c0_4 = arith.constant 0 : index
    %c0_5 = arith.constant 0 : index
    %5 = vector.load %arg2[%c0_3, %c0_4, %c0_5] : memref<5x8x128xf32, #tpu.memory_space<vmem>>, vector<1x8x128xf32>
    %6 = vector.shape_cast %5 : vector<1x8x128xf32> to vector<8x128xf32>
    %cst = arith.constant 1.000000e+00 : f32
    %7 = vector.broadcast %cst : f32 to vector<8x128xf32>
    %8 = arith.cmpf oeq, %4, %7 : vector<8x128xf32>
    %9 = arith.extui %8 : vector<8x128xi1> to vector<8x128xi32>
    %10 = arith.sitofp %9 : vector<8x128xi32> to vector<8x128xf32>
    %cst_6 = arith.constant -1.000000e+00 : f32
    %11 = vector.broadcast %cst_6 : f32 to vector<8x128xf32>
    %12 = arith.cmpf oeq, %4, %11 : vector<8x128xf32>
    %13 = arith.extui %12 : vector<8x128xi1> to vector<8x128xi32>
    %14 = arith.sitofp %13 : vector<8x128xi32> to vector<8x128xf32>
    %15 = arith.negf %6 : vector<8x128xf32>
    %16 = math.exp %15 : vector<8x128xf32>
    %cst_7 = arith.constant 1.000000e+00 : f32
    %17 = vector.broadcast %cst_7 : f32 to vector<8x128xf32>
    %18 = arith.addf %17, %16 : vector<8x128xf32>
    %19 = arith.divf %17, %18 : vector<8x128xf32>
    %cst_8 = arith.constant 1.000000e+00 : f32
    %20 = vector.broadcast %cst_8 : f32 to vector<8x128xf32>
    %21 = arith.subf %20, %19 : vector<8x128xf32>
    %22 = arith.mulf %21, %21 : vector<8x128xf32>
    %cst_9 = arith.constant 9.99999974E-5 : f32
    %23 = vector.broadcast %cst_9 : f32 to vector<8x128xf32>
    %24 = arith.addf %19, %23 : vector<8x128xf32>
    %25 = math.log %24 : vector<8x128xf32>
    %26 = arith.mulf %22, %25 : vector<8x128xf32>
    %27 = arith.mulf %10, %26 : vector<8x128xf32>
    %28 = arith.mulf %19, %19 : vector<8x128xf32>
    %cst_10 = arith.constant 9.99999974E-5 : f32
    %29 = vector.broadcast %cst_10 : f32 to vector<8x128xf32>
    %30 = arith.addf %21, %29 : vector<8x128xf32>
    %31 = math.log %30 : vector<8x128xf32>
    %32 = arith.mulf %28, %31 : vector<8x128xf32>
    %33 = arith.mulf %14, %32 : vector<8x128xf32>
    %34 = arith.mulf %19, %19 : vector<8x128xf32>
    %cst_11 = arith.constant 5.000000e-01 : f32
    %35 = vector.broadcast %cst_11 : f32 to vector<8x128xf32>
    %36 = arith.cmpf ogt, %14, %35 : vector<8x128xf32>
    %cst_12 = arith.constant 1.000000e+00 : f32
    %37 = vector.broadcast %cst_12 : f32 to vector<8x128xf32>
    %38 = arith.select %36, %21, %37 : vector<8x128xi1>, vector<8x128xf32>
    %39 = math.log %38 : vector<8x128xf32>
    %40 = arith.mulf %34, %39 : vector<8x128xf32>
    %41 = arith.mulf %14, %40 : vector<8x128xf32>
    %cst_13 = arith.constant dense<0.000000e+00> : vector<128xf32>
    %42 = vector.multi_reduction <add>, %27, %cst_13 [0] : vector<8x128xf32> to vector<128xf32>
    %43 = vector.shape_cast %42 : vector<128xf32> to vector<1x128xf32>
    %cst_14 = arith.constant dense<0.000000e+00> : vector<128xf32>
    %44 = vector.multi_reduction <add>, %33, %cst_14 [0] : vector<8x128xf32> to vector<128xf32>
    %45 = vector.shape_cast %44 : vector<128xf32> to vector<1x128xf32>
    %cst_15 = arith.constant dense<0.000000e+00> : vector<128xf32>
    %46 = vector.multi_reduction <add>, %41, %cst_15 [0] : vector<8x128xf32> to vector<128xf32>
    %47 = vector.shape_cast %46 : vector<128xf32> to vector<1x128xf32>
    %c1 = arith.constant 1 : index
    %c0_16 = arith.constant 0 : index
    %c0_17 = arith.constant 0 : index
    %48 = vector.load %arg2[%c1, %c0_16, %c0_17] : memref<5x8x128xf32, #tpu.memory_space<vmem>>, vector<1x8x128xf32>
    %49 = vector.shape_cast %48 : vector<1x8x128xf32> to vector<8x128xf32>
    %c1_18 = arith.constant 1 : index
    %c0_19 = arith.constant 0 : index
    %c0_20 = arith.constant 0 : index
    %50 = vector.load %arg3[%c1_18, %c0_19, %c0_20] : memref<5x8x128xf32, #tpu.memory_space<vmem>>, vector<1x8x128xf32>
    %51 = vector.shape_cast %50 : vector<1x8x128xf32> to vector<8x128xf32>
    %52 = arith.subf %49, %51 : vector<8x128xf32>
    %53 = math.absf %52 : vector<8x128xf32>
    %cst_21 = arith.constant 1.000000e+00 : f32
    %54 = vector.broadcast %cst_21 : f32 to vector<8x128xf32>
    %55 = arith.cmpf olt, %53, %54 : vector<8x128xf32>
    %cst_22 = arith.constant 5.000000e-01 : f32
    %56 = vector.broadcast %cst_22 : f32 to vector<8x128xf32>
    %57 = arith.mulf %56, %52 : vector<8x128xf32>
    %58 = arith.mulf %57, %52 : vector<8x128xf32>
    %cst_23 = arith.constant 5.000000e-01 : f32
    %59 = vector.broadcast %cst_23 : f32 to vector<8x128xf32>
    %60 = arith.subf %53, %59 : vector<8x128xf32>
    %61 = arith.select %55, %58, %60 : vector<8x128xi1>, vector<8x128xf32>
    %62 = arith.mulf %10, %61 : vector<8x128xf32>
    %cst_24 = arith.constant dense<0.000000e+00> : vector<128xf32>
    %63 = vector.multi_reduction <add>, %62, %cst_24 [0] : vector<8x128xf32> to vector<128xf32>
    %64 = vector.shape_cast %63 : vector<128xf32> to vector<1x128xf32>
    %c2 = arith.constant 2 : index
    %c0_25 = arith.constant 0 : index
    %c0_26 = arith.constant 0 : index
    %65 = vector.load %arg2[%c2, %c0_25, %c0_26] : memref<5x8x128xf32, #tpu.memory_space<vmem>>, vector<1x8x128xf32>
    %66 = vector.shape_cast %65 : vector<1x8x128xf32> to vector<8x128xf32>
    %c2_27 = arith.constant 2 : index
    %c0_28 = arith.constant 0 : index
    %c0_29 = arith.constant 0 : index
    %67 = vector.load %arg3[%c2_27, %c0_28, %c0_29] : memref<5x8x128xf32, #tpu.memory_space<vmem>>, vector<1x8x128xf32>
    %68 = vector.shape_cast %67 : vector<1x8x128xf32> to vector<8x128xf32>
    %69 = arith.subf %66, %68 : vector<8x128xf32>
    %70 = math.absf %69 : vector<8x128xf32>
    %cst_30 = arith.constant 1.000000e+00 : f32
    %71 = vector.broadcast %cst_30 : f32 to vector<8x128xf32>
    %72 = arith.cmpf olt, %70, %71 : vector<8x128xf32>
    %cst_31 = arith.constant 5.000000e-01 : f32
    %73 = vector.broadcast %cst_31 : f32 to vector<8x128xf32>
    %74 = arith.mulf %73, %69 : vector<8x128xf32>
    %75 = arith.mulf %74, %69 : vector<8x128xf32>
    %cst_32 = arith.constant 5.000000e-01 : f32
    %76 = vector.broadcast %cst_32 : f32 to vector<8x128xf32>
    %77 = arith.subf %70, %76 : vector<8x128xf32>
    %78 = arith.select %72, %75, %77 : vector<8x128xi1>, vector<8x128xf32>
    %79 = arith.mulf %10, %78 : vector<8x128xf32>
    %cst_33 = arith.constant dense<0.000000e+00> : vector<128xf32>
    %80 = vector.multi_reduction <add>, %79, %cst_33 [0] : vector<8x128xf32> to vector<128xf32>
    %81 = vector.shape_cast %80 : vector<128xf32> to vector<1x128xf32>
    %c3 = arith.constant 3 : index
    %c0_34 = arith.constant 0 : index
    %c0_35 = arith.constant 0 : index
    %82 = vector.load %arg2[%c3, %c0_34, %c0_35] : memref<5x8x128xf32, #tpu.memory_space<vmem>>, vector<1x8x128xf32>
    %83 = vector.shape_cast %82 : vector<1x8x128xf32> to vector<8x128xf32>
    %c3_36 = arith.constant 3 : index
    %c0_37 = arith.constant 0 : index
    %c0_38 = arith.constant 0 : index
    %84 = vector.load %arg3[%c3_36, %c0_37, %c0_38] : memref<5x8x128xf32, #tpu.memory_space<vmem>>, vector<1x8x128xf32>
    %85 = vector.shape_cast %84 : vector<1x8x128xf32> to vector<8x128xf32>
    %86 = arith.subf %83, %85 : vector<8x128xf32>
    %87 = math.absf %86 : vector<8x128xf32>
    %cst_39 = arith.constant 1.000000e+00 : f32
    %88 = vector.broadcast %cst_39 : f32 to vector<8x128xf32>
    %89 = arith.cmpf olt, %87, %88 : vector<8x128xf32>
    %cst_40 = arith.constant 5.000000e-01 : f32
    %90 = vector.broadcast %cst_40 : f32 to vector<8x128xf32>
    %91 = arith.mulf %90, %86 : vector<8x128xf32>
    %92 = arith.mulf %91, %86 : vector<8x128xf32>
    %cst_41 = arith.constant 5.000000e-01 : f32
    %93 = vector.broadcast %cst_41 : f32 to vector<8x128xf32>
    %94 = arith.subf %87, %93 : vector<8x128xf32>
    %95 = arith.select %89, %92, %94 : vector<8x128xi1>, vector<8x128xf32>
    %96 = arith.mulf %10, %95 : vector<8x128xf32>
    %cst_42 = arith.constant dense<0.000000e+00> : vector<128xf32>
    %97 = vector.multi_reduction <add>, %96, %cst_42 [0] : vector<8x128xf32> to vector<128xf32>
    %98 = vector.shape_cast %97 : vector<128xf32> to vector<1x128xf32>
    %c4 = arith.constant 4 : index
    %c0_43 = arith.constant 0 : index
    %c0_44 = arith.constant 0 : index
    %99 = vector.load %arg2[%c4, %c0_43, %c0_44] : memref<5x8x128xf32, #tpu.memory_space<vmem>>, vector<1x8x128xf32>
    %100 = vector.shape_cast %99 : vector<1x8x128xf32> to vector<8x128xf32>
    %c4_45 = arith.constant 4 : index
    %c0_46 = arith.constant 0 : index
    %c0_47 = arith.constant 0 : index
    %101 = vector.load %arg3[%c4_45, %c0_46, %c0_47] : memref<5x8x128xf32, #tpu.memory_space<vmem>>, vector<1x8x128xf32>
    %102 = vector.shape_cast %101 : vector<1x8x128xf32> to vector<8x128xf32>
    %103 = arith.subf %100, %102 : vector<8x128xf32>
    %104 = math.absf %103 : vector<8x128xf32>
    %cst_48 = arith.constant 1.000000e+00 : f32
    %105 = vector.broadcast %cst_48 : f32 to vector<8x128xf32>
    %106 = arith.cmpf olt, %104, %105 : vector<8x128xf32>
    %cst_49 = arith.constant 5.000000e-01 : f32
    %107 = vector.broadcast %cst_49 : f32 to vector<8x128xf32>
    %108 = arith.mulf %107, %103 : vector<8x128xf32>
    %109 = arith.mulf %108, %103 : vector<8x128xf32>
    %cst_50 = arith.constant 5.000000e-01 : f32
    %110 = vector.broadcast %cst_50 : f32 to vector<8x128xf32>
    %111 = arith.subf %104, %110 : vector<8x128xf32>
    %112 = arith.select %106, %109, %111 : vector<8x128xi1>, vector<8x128xf32>
    %113 = arith.mulf %10, %112 : vector<8x128xf32>
    %cst_51 = arith.constant dense<0.000000e+00> : vector<128xf32>
    %114 = vector.multi_reduction <add>, %113, %cst_51 [0] : vector<8x128xf32> to vector<128xf32>
    %115 = vector.shape_cast %114 : vector<128xf32> to vector<1x128xf32>
    %cst_52 = arith.constant dense<0.000000e+00> : vector<128xf32>
    %116 = vector.multi_reduction <add>, %10, %cst_52 [0] : vector<8x128xf32> to vector<128xf32>
    %117 = vector.shape_cast %116 : vector<128xf32> to vector<1x128xf32>
    %cst_53 = arith.constant dense<0.000000e+00> : vector<128xf32>
    %118 = vector.multi_reduction <add>, %14, %cst_53 [0] : vector<8x128xf32> to vector<128xf32>
    %119 = vector.shape_cast %118 : vector<128xf32> to vector<1x128xf32>
    %cst_54 = arith.constant 0.699999988 : f32
    %120 = vector.broadcast %cst_54 : f32 to vector<8x128xf32>
    %121 = arith.cmpf oge, %19, %120 : vector<8x128xf32>
    %122 = arith.extui %121 : vector<8x128xi1> to vector<8x128xi32>
    %123 = arith.sitofp %122 : vector<8x128xi32> to vector<8x128xf32>
    %124 = arith.mulf %10, %123 : vector<8x128xf32>
    %cst_55 = arith.constant dense<0.000000e+00> : vector<128xf32>
    %125 = vector.multi_reduction <add>, %124, %cst_55 [0] : vector<8x128xf32> to vector<128xf32>
    %126 = vector.shape_cast %125 : vector<128xf32> to vector<1x128xf32>
    %cst_56 = arith.constant 3.000000e-01 : f32
    %127 = vector.broadcast %cst_56 : f32 to vector<8x128xf32>
    %128 = arith.cmpf olt, %19, %127 : vector<8x128xf32>
    %129 = arith.extui %128 : vector<8x128xi1> to vector<8x128xi32>
    %130 = arith.sitofp %129 : vector<8x128xi32> to vector<8x128xf32>
    %131 = arith.mulf %14, %130 : vector<8x128xf32>
    %cst_57 = arith.constant dense<0.000000e+00> : vector<128xf32>
    %132 = vector.multi_reduction <add>, %131, %cst_57 [0] : vector<8x128xf32> to vector<128xf32>
    %133 = vector.shape_cast %132 : vector<128xf32> to vector<1x128xf32>
    %134 = tpu.iota {dimensions = array<i32: 0>} : vector<16x128xi32>
    %cst_58 = arith.constant 0.000000e+00 : f32
    %135 = vector.broadcast %cst_58 : f32 to vector<16x128xf32>
    %c0_i32_59 = arith.constant 0 : i32
    %136 = vector.broadcast %c0_i32_59 : i32 to vector<16x128xi32>
    %137 = arith.cmpi eq, %134, %136 : vector<16x128xi32>
    %cst_60 = arith.constant 0.000000e+00 : f32
    %138 = vector.shape_cast %43 : vector<1x128xf32> to vector<1x128xf32>
    %139 = vector.broadcast %138 : vector<1x128xf32> to vector<16x128xf32>
    %140 = vector.broadcast %cst_60 : f32 to vector<16x128xf32>
    %141 = arith.select %137, %139, %140 : vector<16x128xi1>, vector<16x128xf32>
    %142 = arith.addf %135, %141 : vector<16x128xf32>
    %c1_i32 = arith.constant 1 : i32
    %143 = vector.broadcast %c1_i32 : i32 to vector<16x128xi32>
    %144 = arith.cmpi eq, %134, %143 : vector<16x128xi32>
    %cst_61 = arith.constant 0.000000e+00 : f32
    %145 = vector.shape_cast %45 : vector<1x128xf32> to vector<1x128xf32>
    %146 = vector.broadcast %145 : vector<1x128xf32> to vector<16x128xf32>
    %147 = vector.broadcast %cst_61 : f32 to vector<16x128xf32>
    %148 = arith.select %144, %146, %147 : vector<16x128xi1>, vector<16x128xf32>
    %149 = arith.addf %142, %148 : vector<16x128xf32>
    %c2_i32 = arith.constant 2 : i32
    %150 = vector.broadcast %c2_i32 : i32 to vector<16x128xi32>
    %151 = arith.cmpi eq, %134, %150 : vector<16x128xi32>
    %cst_62 = arith.constant 0.000000e+00 : f32
    %152 = vector.shape_cast %47 : vector<1x128xf32> to vector<1x128xf32>
    %153 = vector.broadcast %152 : vector<1x128xf32> to vector<16x128xf32>
    %154 = vector.broadcast %cst_62 : f32 to vector<16x128xf32>
    %155 = arith.select %151, %153, %154 : vector<16x128xi1>, vector<16x128xf32>
    %156 = arith.addf %149, %155 : vector<16x128xf32>
    %c3_i32 = arith.constant 3 : i32
    %157 = vector.broadcast %c3_i32 : i32 to vector<16x128xi32>
    %158 = arith.cmpi eq, %134, %157 : vector<16x128xi32>
    %cst_63 = arith.constant 0.000000e+00 : f32
    %159 = vector.shape_cast %64 : vector<1x128xf32> to vector<1x128xf32>
    %160 = vector.broadcast %159 : vector<1x128xf32> to vector<16x128xf32>
    %161 = vector.broadcast %cst_63 : f32 to vector<16x128xf32>
    %162 = arith.select %158, %160, %161 : vector<16x128xi1>, vector<16x128xf32>
    %163 = arith.addf %156, %162 : vector<16x128xf32>
    %c4_i32 = arith.constant 4 : i32
    %164 = vector.broadcast %c4_i32 : i32 to vector<16x128xi32>
    %165 = arith.cmpi eq, %134, %164 : vector<16x128xi32>
    %cst_64 = arith.constant 0.000000e+00 : f32
    %166 = vector.shape_cast %81 : vector<1x128xf32> to vector<1x128xf32>
    %167 = vector.broadcast %166 : vector<1x128xf32> to vector<16x128xf32>
    %168 = vector.broadcast %cst_64 : f32 to vector<16x128xf32>
    %169 = arith.select %165, %167, %168 : vector<16x128xi1>, vector<16x128xf32>
    %170 = arith.addf %163, %169 : vector<16x128xf32>
    %c5_i32 = arith.constant 5 : i32
    %171 = vector.broadcast %c5_i32 : i32 to vector<16x128xi32>
    %172 = arith.cmpi eq, %134, %171 : vector<16x128xi32>
    %cst_65 = arith.constant 0.000000e+00 : f32
    %173 = vector.shape_cast %98 : vector<1x128xf32> to vector<1x128xf32>
    %174 = vector.broadcast %173 : vector<1x128xf32> to vector<16x128xf32>
    %175 = vector.broadcast %cst_65 : f32 to vector<16x128xf32>
    %176 = arith.select %172, %174, %175 : vector<16x128xi1>, vector<16x128xf32>
    %177 = arith.addf %170, %176 : vector<16x128xf32>
    %c6_i32 = arith.constant 6 : i32
    %178 = vector.broadcast %c6_i32 : i32 to vector<16x128xi32>
    %179 = arith.cmpi eq, %134, %178 : vector<16x128xi32>
    %cst_66 = arith.constant 0.000000e+00 : f32
    %180 = vector.shape_cast %115 : vector<1x128xf32> to vector<1x128xf32>
    %181 = vector.broadcast %180 : vector<1x128xf32> to vector<16x128xf32>
    %182 = vector.broadcast %cst_66 : f32 to vector<16x128xf32>
    %183 = arith.select %179, %181, %182 : vector<16x128xi1>, vector<16x128xf32>
    %184 = arith.addf %177, %183 : vector<16x128xf32>
    %c7_i32 = arith.constant 7 : i32
    %185 = vector.broadcast %c7_i32 : i32 to vector<16x128xi32>
    %186 = arith.cmpi eq, %134, %185 : vector<16x128xi32>
    %cst_67 = arith.constant 0.000000e+00 : f32
    %187 = vector.shape_cast %117 : vector<1x128xf32> to vector<1x128xf32>
    %188 = vector.broadcast %187 : vector<1x128xf32> to vector<16x128xf32>
    %189 = vector.broadcast %cst_67 : f32 to vector<16x128xf32>
    %190 = arith.select %186, %188, %189 : vector<16x128xi1>, vector<16x128xf32>
    %191 = arith.addf %184, %190 : vector<16x128xf32>
    %c8_i32 = arith.constant 8 : i32
    %192 = vector.broadcast %c8_i32 : i32 to vector<16x128xi32>
    %193 = arith.cmpi eq, %134, %192 : vector<16x128xi32>
    %cst_68 = arith.constant 0.000000e+00 : f32
    %194 = vector.shape_cast %119 : vector<1x128xf32> to vector<1x128xf32>
    %195 = vector.broadcast %194 : vector<1x128xf32> to vector<16x128xf32>
    %196 = vector.broadcast %cst_68 : f32 to vector<16x128xf32>
    %197 = arith.select %193, %195, %196 : vector<16x128xi1>, vector<16x128xf32>
    %198 = arith.addf %191, %197 : vector<16x128xf32>
    %c9_i32 = arith.constant 9 : i32
    %199 = vector.broadcast %c9_i32 : i32 to vector<16x128xi32>
    %200 = arith.cmpi eq, %134, %199 : vector<16x128xi32>
    %cst_69 = arith.constant 0.000000e+00 : f32
    %201 = vector.shape_cast %126 : vector<1x128xf32> to vector<1x128xf32>
    %202 = vector.broadcast %201 : vector<1x128xf32> to vector<16x128xf32>
    %203 = vector.broadcast %cst_69 : f32 to vector<16x128xf32>
    %204 = arith.select %200, %202, %203 : vector<16x128xi1>, vector<16x128xf32>
    %205 = arith.addf %198, %204 : vector<16x128xf32>
    %c10_i32 = arith.constant 10 : i32
    %206 = vector.broadcast %c10_i32 : i32 to vector<16x128xi32>
    %207 = arith.cmpi eq, %134, %206 : vector<16x128xi32>
    %cst_70 = arith.constant 0.000000e+00 : f32
    %208 = vector.shape_cast %133 : vector<1x128xf32> to vector<1x128xf32>
    %209 = vector.broadcast %208 : vector<1x128xf32> to vector<16x128xf32>
    %210 = vector.broadcast %cst_70 : f32 to vector<16x128xf32>
    %211 = arith.select %207, %209, %210 : vector<16x128xi1>, vector<16x128xf32>
    %212 = arith.addf %205, %211 : vector<16x128xf32>
    %c0_71 = arith.constant 0 : index
    %c0_72 = arith.constant 0 : index
    %c0_73 = arith.constant 0 : index
    %213 = vector.load %arg4[%c0_71, %c0_72, %c0_73] : memref<1x16x128xf32, #tpu.memory_space<vmem>>, vector<1x16x128xf32>
    %214 = vector.shape_cast %212 : vector<16x128xf32> to vector<1x16x128xf32>
    %215 = arith.addf %213, %214 : vector<1x16x128xf32>
    %c0_74 = arith.constant 0 : index
    %c0_75 = arith.constant 0 : index
    %c0_76 = arith.constant 0 : index
    %216 = vector.load %arg4[%c0_74, %c0_75, %c0_76] : memref<1x16x128xf32, #tpu.memory_space<vmem>>, vector<1x16x128xf32>
    tpu.vector_store %arg4[%c0_74, %c0_75, %c0_76], %215 {strides = array<i32>} : memref<1x16x128xf32, #tpu.memory_space<vmem>>, vector<1x16x128xf32>,
    return
  }
  func.func @transform_0(%arg0: i32, %arg1: i32) -> (i32, i32, i32) {
    %c1_i32 = arith.constant 1 : i32
    %0 = arith.muli %arg0, %c1_i32 : i32
    %1 = arith.addi %0, %arg1 : i32
    %c0_i32 = arith.constant 0 : i32
    %c0_i32_0 = arith.constant 0 : i32
    %c0_i32_1 = arith.constant 0 : i32
    return %c0_i32, %1, %c0_i32_0 : i32, i32, i32
  }
  func.func @transform_1(%arg0: i32, %arg1: i32) -> (i32, i32, i32) {
    %c1_i32 = arith.constant 1 : i32
    %0 = arith.muli %arg0, %c1_i32 : i32
    %1 = arith.addi %0, %arg1 : i32
    %c0_i32 = arith.constant 0 : i32
    %c0_i32_0 = arith.constant 0 : i32
    %c0_i32_1 = arith.constant 0 : i32
    return %c0_i32, %1, %c0_i32_0 : i32, i32, i32
  }
  func.func @transform_2(%arg0: i32, %arg1: i32) -> (i32, i32, i32) {
    %c0_i32 = arith.constant 0 : i32
    %c0_i32_0 = arith.constant 0 : i32
    %c0_i32_1 = arith.constant 0 : i32
    return %arg0, %c0_i32, %c0_i32_0 : i32, i32, i32
  }
}

</mosaic_0001>

<llo_original>
// kernel: focal_loss_forward.1
$region0: #{focal_loss_forward.1}
  #allocation0 [shape = 'u32[]', space=smem, size = 0x4, offset = 0x4, fixed_abs, tag = 'smem constant byte address 0x4 - core index']
  #allocation1 [shape = 'u32[144,128]{1,0:T(1,128)}', space=vmem, size = 0x12000, scoped, tag = 'internal scratch']
  %s0 = inlined_call_operand.vmem [shape: f32[5,16,128], index: 0, kind: input, shape index: {}]
  %s1 = inlined_call_operand.vmem [shape: f32[5,16,128], index: 1, kind: input, shape index: {}]
  %s2 = inlined_call_operand.vmem [shape: f32[2,16,128], index: 2, kind: output, shape index: {}]
  %s3 = sld [smem:[#allocation0]]
  $region121: #{focal_loss_forward.1} parent=0
    _
  %s5 = ssub.s32 1, %s3
  %s6 = scalar_select 0, %s5, %s3
  $region1: #{focal_loss_forward.1} parent=0
    #allocation2 [shape = 'u8[40960]{0}', space=vmem, size = 0xa000, scoped, tag = 'input window, operand 0']
    #allocation3 [shape = 'u8[40960]{0}', space=vmem, size = 0xa000, scoped, tag = 'input window, operand 1']
    loop: start=0, step=1, limit=4
    $region2: #{focal_loss_forward.1} parent=1 // loop_pre_header
      _
    $region3: #{focal_loss_forward.1} parent=1 // loop_header
      %s8 = sphi 0, %s12
      %p9 = scmp.ge.s32.totalorder %s8, 4
      %s15 = sphi 0, %s27
      %s16 = sphi 0, %s23
      %s17 = sphi 0, %s15
      %s18 = sphi 0, %s16
      %s19 = sphi 0, %s17
      %s20 = sphi 0, %s18
      %s32 = sphi 0, %s34
      %s35 = sphi 0, %s32
      %s36 = sphi 0, %s35
      %s52 = sphi 0, %s36
      %s60 = sphi 0, %s62
      %s63 = sphi 0, %s60
      %s64 = sphi 0, %s63
      %s80 = sphi 0, %s64
      %s86 = sphi 0, %s88
      %s89 = sphi 0, %s86
      %s90 = sphi 0, %s89
      %s106 = sphi 0, %s90
    $region4: #{focal_loss_forward.1} parent=1 // loop_header_branch
      %11 = sbr.rel (%p9) target = $region8
    $region5: #{focal_loss_forward.1} parent=1 // loop_body
      %s13 = ssub.s32 %s8, 1
      %s14 = ssub.s32 %s8, 2
      %s21 = sadd.s32 1, %s16
      %p22 = scmp.ge.s32.totalorder %s21, 1
      %s23 = scalar_select %p22, 0, %s21
      %s24 = sadd.s32 1, %s15
      %s25 = scalar_select %p22, %s24, %s15
      %p26 = scmp.ge.s32.totalorder %s25, 2
      %s27 = scalar_select %p26, 0, %s25
      %s28 = sadd.s32 %s15, %s16
      %s29 = sadd.s32 %s27, %s23
      %s30 = ssub.s32 %s28, %s29
      %p31 = scmp.eq.s32.totalorder %s30, 0
      %s33 = sadd.s32 %s32, 1
      %s34 = scalar_select %p31, %s32, %s33
      %p37 = pneg %p31
      %p38 = scmp.eq.s32.totalorder %s8, 1
      %p39 = por %p37, %p38
      %p40 = scmp.ne.s32.totalorder %s32, %s35
      %p41 = scmp.eq.s32.totalorder %s8, 0
      %p42 = por %p40, %p41
      %p43 = scmp.ne.s32.totalorder %s32, %s35
      %p44 = scmp.eq.s32.totalorder %s13, 1
      %p45 = por %p43, %p44
      %p46 = scmp.ne.s32.totalorder %s35, %s36
      %p47 = scmp.eq.s32.totalorder %s13, 0
      %p48 = por %p46, %p47
      %p49 = scmp.ne.s32.totalorder %s35, %s36
      %p50 = scmp.eq.s32.totalorder %s14, 1
      %p51 = por %p49, %p50
      %p53 = scmp.ne.s32.totalorder %s36, %s52
      %p54 = scmp.eq.s32.totalorder %s14, 0
      %p55 = por %p53, %p54
      %s56 = sadd.s32 %s15, %s16
      %s57 = sadd.s32 %s27, %s23
      %s58 = ssub.s32 %s56, %s57
      %p59 = scmp.eq.s32.totalorder %s58, 0
      %s61 = sadd.s32 %s60, 1
      %s62 = scalar_select %p59, %s60, %s61
      %p65 = pneg %p59
      %p66 = scmp.eq.s32.totalorder %s8, 1
      %p67 = por %p65, %p66
      %p68 = scmp.ne.s32.totalorder %s60, %s63
      %p69 = scmp.eq.s32.totalorder %s8, 0
      %p70 = por %p68, %p69
      %p71 = scmp.ne.s32.totalorder %s60, %s63
      %p72 = scmp.eq.s32.totalorder %s13, 1
      %p73 = por %p71, %p72
      %p74 = scmp.ne.s32.totalorder %s63, %s64
      %p75 = scmp.eq.s32.totalorder %s13, 0
      %p76 = por %p74, %p75
      %p77 = scmp.ne.s32.totalorder %s63, %s64
      %p78 = scmp.eq.s32.totalorder %s14, 1
      %p79 = por %p77, %p78
      %p81 = scmp.ne.s32.totalorder %s64, %s80
      %p82 = scmp.eq.s32.totalorder %s14, 0
      %p83 = por %p81, %p82
      %s84 = ssub.s32 %s15, %s27
      %p85 = scmp.eq.s32.totalorder %s84, 0
      %s87 = sadd.s32 %s86, 1
      %s88 = scalar_select %p85, %s86, %s87
      %p91 = pneg %p85
      %p92 = scmp.eq.s32.totalorder %s8, 1
      %p93 = por %p91, %p92
      %p94 = scmp.ne.s32.totalorder %s86, %s89
      %p95 = scmp.eq.s32.totalorder %s8, 0
      %p96 = por %p94, %p95
      %p97 = scmp.ne.s32.totalorder %s86, %s89
      %p98 = scmp.eq.s32.totalorder %s13, 1
      %p99 = por %p97, %p98
      %p100 = scmp.ne.s32.totalorder %s89, %s90
      %p101 = scmp.eq.s32.totalorder %s13, 0
      %p102 = por %p100, %p101
      %p103 = scmp.ne.s32.totalorder %s89, %s90
      %p104 = scmp.eq.s32.totalorder %s14, 1
      %p105 = por %p103, %p104
      %p107 = scmp.ne.s32.totalorder %s90, %s106
      %p108 = scmp.eq.s32.totalorder %s14, 0
      %p109 = por %p107, %p108
      %p110 = scmp.le.s32.totalorder 1, %s8
      %p111 = scmp.lt.s32.totalorder %s8, 3
      %p112 = pnand %p110, %p111
      %p113 = pneg %p112
      // Predicated region
      $region9: #{focal_loss_forward.1} parent=5 // pred_check
        _
      $region10: #{focal_loss_forward.1} parent=5 // pred_check_branch
        %115 = sbr.rel (%p112) target = $region12
      $region11: #{focal_loss_forward.1} parent=5 // pred_region
        %s116 = ssub.s32 %s8, 1
      $region12: #{focal_loss_forward.1} parent=5 // pred_fallthru
        _
      %p117 = scmp.lt.s32.totalorder %s8, 2
      // Predicated region
      $region13: #{focal_loss_forward.1} parent=5 // pred_check
        %p118 = pneg %p117
      $region14: #{focal_loss_forward.1} parent=5 // pred_check_branch
        %120 = sbr.rel (%p118) target = $region16
      $region15: #{focal_loss_forward.1} parent=5 // pred_region
        // Predicated region
        $region17: #{focal_loss_forward.1} parent=15 // pred_check
          %p121 = pneg %p42
        $region18: #{focal_loss_forward.1} parent=15 // pred_check_branch
          %123 = sbr.rel (%p121) target = $region20
        $region19: #{focal_loss_forward.1} parent=15 // pred_region
          %s124 = sand.u32 %s32, 1
          %s125 = sand.u32 %s32, 1
          %s126 = smul.addr %s125, 40
          %s127 = scalar_lea.vmem [#allocation2], %s126
          %s128 = sadd.s32 %s15, %s16
          %s129 = smul.addr %s128, 8
          %s130 = scalar_lea.vmem %s0, %s129
          // Predicated region
          $region21: #{focal_loss_forward.1} parent=19 // pred_check
            _
          $region22: #{focal_loss_forward.1} parent=19 // pred_check_branch
            %132 = sbr.rel (0) target = $region24
          $region23: #{focal_loss_forward.1} parent=19 // pred_region
            // Predicated region
            $region25: #{focal_loss_forward.1} parent=23 // pred_check
              _
            $region26: #{focal_loss_forward.1} parent=23 // pred_check_branch
              %134 = sbr.rel (0) target = $region28
            $region27: #{focal_loss_forward.1} parent=23 // pred_region
              // Predicated region
              $region40: #{focal_loss_forward.1} parent=27 // pred_check
                _
              $region41: #{focal_loss_forward.1} parent=27 // pred_check_branch
                %157 = sbr.rel (0) target = $region43
              $region42: #{focal_loss_forward.1} parent=27 // pred_region
                loop: start=0, step=1, limit=1
                $region44: #{focal_loss_forward.1} parent=42 // loop_pre_header
                  _
                $region45: #{focal_loss_forward.1} parent=42 // loop_header
                  %s159 = sphi 0, %s163
                  %p160 = scmp.ge.s32.totalorder %s159, 1
                  %s164 = sphi %s130, %s130
                  %s165 = sphi %s127, %s127
                $region46: #{focal_loss_forward.1} parent=42 // loop_header_branch
                  %162 = sbr.rel (%p160) target = $region50
                $region47: #{focal_loss_forward.1} parent=42 // loop_body
                  %v166 = vld [vmem:[%s164] sm:$0xff]
                  %167 = vst [vmem:[%s165] sm:$0xff] %v166
                  %v168 = vld [vmem:[%s164 + $0x10] sm:$0xff]
                  %169 = vst [vmem:[%s165 + $0x8] sm:$0xff] %v168
                  %v170 = vld [vmem:[%s164 + $0x20] sm:$0xff]
                  %171 = vst [vmem:[%s165 + $0x10] sm:$0xff] %v170
                  %v172 = vld [vmem:[%s164 + $0x30] sm:$0xff]
                  %173 = vst [vmem:[%s165 + $0x18] sm:$0xff] %v172
                  %v174 = vld [vmem:[%s164 + $0x40] sm:$0xff]
                  %175 = vst [vmem:[%s165 + $0x20] sm:$0xff] %v174
                $region48: #{focal_loss_forward.1} parent=42 // loop_footer
                  %s163 = sadd.s32 1, %s159
                $region49: #{focal_loss_forward.1} parent=42 // loop_footer_branch
                  %158 = sbr.rel target = $region45
                $region50: #{focal_loss_forward.1} parent=42 // loop_exit
                  _
              $region43: #{focal_loss_forward.1} parent=27 // pred_fallthru
                _
              // Predicated region
              $region51: #{focal_loss_forward.1} parent=27 // pred_check
                _
              $region52: #{focal_loss_forward.1} parent=27 // pred_check_branch
                %177 = sbr.rel target = $region54
              $region53: #{focal_loss_forward.1} parent=27 // pred_region
                _
              $region54: #{focal_loss_forward.1} parent=27 // pred_fallthru
                _
            $region28: #{focal_loss_forward.1} parent=23 // pred_fallthru
              _
            // Predicated region
            $region29: #{focal_loss_forward.1} parent=23 // pred_check
              _
            $region30: #{focal_loss_forward.1} parent=23 // pred_check_branch
              %136 = sbr.rel target = $region32
            $region31: #{focal_loss_forward.1} parent=23 // pred_region
              loop: start=0, step=1, limit=1
              $region33: #{focal_loss_forward.1} parent=31 // loop_pre_header
                _
              $region34: #{focal_loss_forward.1} parent=31 // loop_header
                %s139 = sphi 0, %s143
                %p140 = scmp.ge.s32.totalorder %s139, 1
                %s144 = sphi %s130, %s130
                %s145 = sphi %s127, %s127
              $region35: #{focal_loss_forward.1} parent=31 // loop_header_branch
                %142 = sbr.rel (%p140) target = $region39
              $region36: #{focal_loss_forward.1} parent=31 // loop_body
                %v146 = vld [vmem:[%s144] sm:$0xff]
                %147 = vst [vmem:[%s145] sm:$0xff] %v146
                %v148 = vld [vmem:[%s144 + $0x10] sm:$0xff]
                %149 = vst [vmem:[%s145 + $0x8] sm:$0xff] %v148
                %v150 = vld [vmem:[%s144 + $0x20] sm:$0xff]
                %151 = vst [vmem:[%s145 + $0x10] sm:$0xff] %v150
                %v152 = vld [vmem:[%s144 + $0x30] sm:$0xff]
                %153 = vst [vmem:[%s145 + $0x18] sm:$0xff] %v152
                %v154 = vld [vmem:[%s144 + $0x40] sm:$0xff]
                %155 = vst [vmem:[%s145 + $0x20] sm:$0xff] %v154
              $region37: #{focal_loss_forward.1} parent=31 // loop_footer
                %s143 = sadd.s32 1, %s139
              $region38: #{focal_loss_forward.1} parent=31 // loop_footer_branch
                %138 = sbr.rel target = $region34
              $region39: #{focal_loss_forward.1} parent=31 // loop_exit
                _
            $region32: #{focal_loss_forward.1} parent=23 // pred_fallthru
              _
          $region24: #{focal_loss_forward.1} parent=19 // pred_fallthru
            _
          %178 = vnop
        $region20: #{focal_loss_forward.1} parent=15 // pred_fallthru
          _
        // Predicated region
        $region55: #{focal_loss_forward.1} parent=15 // pred_check
          %p179 = pneg %p70
        $region56: #{focal_loss_forward.1} parent=15 // pred_check_branch
          %181 = sbr.rel (%p179) target = $region58
        $region57: #{focal_loss_forward.1} parent=15 // pred_region
          %s182 = sand.u32 %s60, 1
          %s183 = sand.u32 %s60, 1
          %s184 = smul.addr %s183, 40
          %s185 = scalar_lea.vmem [#allocation3], %s184
          %s186 = sadd.s32 %s15, %s16
          %s187 = smul.addr %s186, 8
          %s188 = scalar_lea.vmem %s1, %s187
          // Predicated region
          $region59: #{focal_loss_forward.1} parent=57 // pred_check
            _
          $region60: #{focal_loss_forward.1} parent=57 // pred_check_branch
            %190 = sbr.rel (0) target = $region62
          $region61: #{focal_loss_forward.1} parent=57 // pred_region
            // Predicated region
            $region63: #{focal_loss_forward.1} parent=61 // pred_check
              _
            $region64: #{focal_loss_forward.1} parent=61 // pred_check_branch
              %192 = sbr.rel (0) target = $region66
            $region65: #{focal_loss_forward.1} parent=61 // pred_region
              // Predicated region
              $region78: #{focal_loss_forward.1} parent=65 // pred_check
                _
              $region79: #{focal_loss_forward.1} parent=65 // pred_check_branch
                %215 = sbr.rel (0) target = $region81
              $region80: #{focal_loss_forward.1} parent=65 // pred_region
                loop: start=0, step=1, limit=1
                $region82: #{focal_loss_forward.1} parent=80 // loop_pre_header
                  _
                $region83: #{focal_loss_forward.1} parent=80 // loop_header
                  %s217 = sphi 0, %s221
                  %p218 = scmp.ge.s32.totalorder %s217, 1
                  %s222 = sphi %s188, %s188
                  %s223 = sphi %s185, %s185
                $region84: #{focal_loss_forward.1} parent=80 // loop_header_branch
                  %220 = sbr.rel (%p218) target = $region88
                $region85: #{focal_loss_forward.1} parent=80 // loop_body
                  %v224 = vld [vmem:[%s222] sm:$0xff]
                  %225 = vst [vmem:[%s223] sm:$0xff] %v224
                  %v226 = vld [vmem:[%s222 + $0x10] sm:$0xff]
                  %227 = vst [vmem:[%s223 + $0x8] sm:$0xff] %v226
                  %v228 = vld [vmem:[%s222 + $0x20] sm:$0xff]
                  %229 = vst [vmem:[%s223 + $0x10] sm:$0xff] %v228
                  %v230 = vld [vmem:[%s222 + $0x30] sm:$0xff]
                  %231 = vst [vmem:[%s223 + $0x18] sm:$0xff] %v230
                  %v232 = vld [vmem:[%s222 + $0x40] sm:$0xff]
                  %233 = vst [vmem:[%s223 + $0x20] sm:$0xff] %v232
                $region86: #{focal_loss_forward.1} parent=80 // loop_footer
                  %s221 = sadd.s32 1, %s217
                $region87: #{focal_loss_forward.1} parent=80 // loop_footer_branch
                  %216 = sbr.rel target = $region83
                $region88: #{focal_loss_forward.1} parent=80 // loop_exit
                  _
              $region81: #{focal_loss_forward.1} parent=65 // pred_fallthru
                _
              // Predicated region
              $region89: #{focal_loss_forward.1} parent=65 // pred_check
                _
              $region90: #{focal_loss_forward.1} parent=65 // pred_check_branch
                %235 = sbr.rel target = $region92
              $region91: #{focal_loss_forward.1} parent=65 // pred_region
                _
              $region92: #{focal_loss_forward.1} parent=65 // pred_fallthru
                _
            $region66: #{focal_loss_forward.1} parent=61 // pred_fallthru
              _
            // Predicated region
            $region67: #{focal_loss_forward.1} parent=61 // pred_check
              _
            $region68: #{focal_loss_forward.1} parent=61 // pred_check_branch
              %194 = sbr.rel target = $region70
            $region69: #{focal_loss_forward.1} parent=61 // pred_region
              loop: start=0, step=1, limit=1
              $region71: #{focal_loss_forward.1} parent=69 // loop_pre_header
                _
              $region72: #{focal_loss_forward.1} parent=69 // loop_header
                %s197 = sphi 0, %s201
                %p198 = scmp.ge.s32.totalorder %s197, 1
                %s202 = sphi %s188, %s188
                %s203 = sphi %s185, %s185
              $region73: #{focal_loss_forward.1} parent=69 // loop_header_branch
                %200 = sbr.rel (%p198) target = $region77
              $region74: #{focal_loss_forward.1} parent=69 // loop_body
                %v204 = vld [vmem:[%s202] sm:$0xff]
                %205 = vst [vmem:[%s203] sm:$0xff] %v204
                %v206 = vld [vmem:[%s202 + $0x10] sm:$0xff]
                %207 = vst [vmem:[%s203 + $0x8] sm:$0xff] %v206
                %v208 = vld [vmem:[%s202 + $0x20] sm:$0xff]
                %209 = vst [vmem:[%s203 + $0x10] sm:$0xff] %v208
                %v210 = vld [vmem:[%s202 + $0x30] sm:$0xff]
                %211 = vst [vmem:[%s203 + $0x18] sm:$0xff] %v210
                %v212 = vld [vmem:[%s202 + $0x40] sm:$0xff]
                %213 = vst [vmem:[%s203 + $0x20] sm:$0xff] %v212
              $region75: #{focal_loss_forward.1} parent=69 // loop_footer
                %s201 = sadd.s32 1, %s197
              $region76: #{focal_loss_forward.1} parent=69 // loop_footer_branch
                %196 = sbr.rel target = $region72
              $region77: #{focal_loss_forward.1} parent=69 // loop_exit
                _
            $region70: #{focal_loss_forward.1} parent=61 // pred_fallthru
              _
          $region62: #{focal_loss_forward.1} parent=57 // pred_fallthru
            _
          %236 = vnop
        $region58: #{focal_loss_forward.1} parent=15 // pred_fallthru
          _
      $region16: #{focal_loss_forward.1} parent=5 // pred_fallthru
        _
      %p237 = scmp.le.s32.totalorder 1, %s8
      %p238 = scmp.lt.s32.totalorder %s8, 3
      %p239 = pnand %p237, %p238
      %p240 = pneg %p239
      // Predicated region
      $region93: #{focal_loss_forward.1} parent=5 // pred_check
        _
      $region94: #{focal_loss_forward.1} parent=5 // pred_check_branch
        %242 = sbr.rel (%p239) target = $region96
      $region95: #{focal_loss_forward.1} parent=5 // pred_region
        %s243 = ssub.s32 %s8, 1
        %s244 = sand.u32 %s35, 1
        %s245 = sand.u32 %s35, 1
        %s246 = smul.addr %s245, 40
        %s247 = scalar_lea.vmem [#allocation2], %s246
        // Predicated region
        $region97: #{focal_loss_forward.1} parent=95 // pred_check
          %p248 = pneg %p48
        $region98: #{focal_loss_forward.1} parent=95 // pred_check_branch
          %250 = sbr.rel (%p248) target = $region100
        $region99: #{focal_loss_forward.1} parent=95 // pred_region
          _
        $region100: #{focal_loss_forward.1} parent=95 // pred_fallthru
          _
        %s251 = sand.u32 %s63, 1
        %s252 = sand.u32 %s63, 1
        %s253 = smul.addr %s252, 40
        %s254 = scalar_lea.vmem [#allocation3], %s253
        // Predicated region
        $region101: #{focal_loss_forward.1} parent=95 // pred_check
          %p255 = pneg %p76
        $region102: #{focal_loss_forward.1} parent=95 // pred_check_branch
          %257 = sbr.rel (%p255) target = $region104
        $region103: #{focal_loss_forward.1} parent=95 // pred_region
          _
        $region104: #{focal_loss_forward.1} parent=95 // pred_fallthru
          _
        %s258 = sand.u32 %s35, 1
        %s259 = sand.u32 %s35, 1
        %s260 = smul.addr %s259, 40
        %s261 = scalar_lea.vmem [#allocation2], %s260
        %p262 = pneg %p48
        %p263 = pneg %p45
        %s264 = sand.u32 %s63, 1
        %s265 = sand.u32 %s63, 1
        %s266 = smul.addr %s265, 40
        %s267 = scalar_lea.vmem [#allocation3], %s266
        %p268 = pneg %p76
        %p269 = pneg %p73
        %p270 = pneg %p102
        %p271 = pneg %p99
        %p272 = scmp.lt.s32.totalorder %s17, 1
        %s273 = scalar_select %p272, %s17, 1
        %s274 = smul.addr %s273, 2
        %s275 = smul.addr %s274, 8
        %s276 = scalar_lea.vmem %s2, %s275
        %s277 = sadd.s32 %s17, %s18
        %s278 = sadd.s32 %s17, %s18
        %p279 = scmp.lt.s32.totalorder %s17, 1
        %s280 = scalar_select %p279, %s17, 1
        %s281 = smul.addr %s280, 2
        %s282 = smul.addr %s281, 8
        %s283 = scalar_lea.vmem %s2, %s282
        %p284 = scmp.eq.s32.totalorder %s18, 0
        // Predicated region
        $region105: #{focal_loss_forward.1} parent=95 // pred_check
          %p285 = pneg %p284
        $region106: #{focal_loss_forward.1} parent=95 // pred_check_branch
          %287 = sbr.rel (%p285) target = $region108
        $region107: #{focal_loss_forward.1} parent=95 // pred_region
          %288 = vst [vmem:[%s283] sm:$0xff] 0.0
          %289 = vst [vmem:[%s283 + $0x8] sm:$0xff] 0.0
        $region108: #{focal_loss_forward.1} parent=95 // pred_fallthru
          _
        %v290 = vld [vmem:[%s254] sm:$0xff]
        %v291 = vld [vmem:[%s247] sm:$0xff]
        %vm292 = vcmp.eq.f32.partialorder %v290, 1.0
        %v293 = vsel %vm292, 1, 0
        %v294 = vcvt.s32.f32 %v293
        %vm295 = vcmp.eq.f32.partialorder %v290, -1.0
        %v296 = vsel %vm295, 1, 0
        %v297 = vcvt.s32.f32 %v296
        %v298 = vxor.u32 %v291, 2147483648
        %v299 = vmul.f32 %v298, 1.442695
        %v300 = vpow.pop %v299
        %v301 = vadd.f32 %v300, 1.0
        %v302 = vrcp.pop %v301
        %v303 = vmul.f32 1.0, %v302
        %v304 = vsub.f32 1.0, %v303
        %v305 = vmul.f32 %v304, %v304
        %v306 = vadd.f32 %v303, 0.0001
        %v307 = vlog2.pop %v306
        %v308 = vmul.f32 %v307, 0.6931472
        %v309 = vmul.f32 %v305, %v308
        %v310 = vmul.f32 %v294, %v309
        %v311 = vmul.f32 %v303, %v303
        %v312 = vadd.f32 %v304, 0.0001
        %v313 = vlog2.pop %v312
        %v314 = vmul.f32 %v313, 0.6931472
        %v315 = vmul.f32 %v311, %v314
        %v316 = vmul.f32 %v297, %v315
        %vm317 = vcmp.gt.f32.partialorder %v297, 0.5
        %v318 = vsel %vm317, %v304, 1.0
        %v319 = vlog2.pop %v318
        %v320 = vmul.f32 %v319, 0.6931472
        %v321 = vmul.f32 %v311, %v320
        %v322 = vmul.f32 %v297, %v321
        %v323 = vrot.slane %v310, 4
        %v324 = vadd.f32 %v310, %v323
        %v325 = vrot.slane %v324, 2
        %v326 = vadd.f32 %v324, %v325
        %v327 = vrot.slane %v326, 1
        %v328 = vadd.f32 %v326, %v327
        %v329 = vrot.slane %v316, 4
        %v330 = vadd.f32 %v316, %v329
        %v331 = vrot.slane %v330, 2
        %v332 = vadd.f32 %v330, %v331
        %v333 = vrot.slane %v332, 1
        %v334 = vadd.f32 %v332, %v333
        %v335 = vrot.slane %v322, 4
        %v336 = vadd.f32 %v322, %v335
        %v337 = vrot.slane %v336, 2
        %v338 = vadd.f32 %v336, %v337
        %v339 = vrot.slane %v338, 1
        %v340 = vadd.f32 %v338, %v339
        %s341 = scalar_lea.vmem %s247, 8 [#allocation2]
        %v342 = vld [vmem:[%s341] sm:$0xff]
        %s343 = scalar_lea.vmem %s254, 8 [#allocation3]
        %v344 = vld [vmem:[%s343] sm:$0xff]
        %v345 = vsub.f32 %v342, %v344
        %v346 = vand.u32 2147483647, %v345
        %vm347 = vcmp.lt.f32.partialorder %v346, 1.0
        %v348 = vmul.f32 %v345, 0.5
        %v349 = vmul.f32 %v348, %v345
        %v350 = vsub.f32 %v346, 0.5
        %v351 = vsel %vm347, %v349, %v350
        %v352 = vmul.f32 %v294, %v351
        %v353 = vrot.slane %v352, 4
        %v354 = vadd.f32 %v352, %v353
        %v355 = vrot.slane %v354, 2
        %v356 = vadd.f32 %v354, %v355
        %v357 = vrot.slane %v356, 1
        %v358 = vadd.f32 %v356, %v357
        %s359 = scalar_lea.vmem %s247, 16 [#allocation2]
        %v360 = vld [vmem:[%s359] sm:$0xff]
        %s361 = scalar_lea.vmem %s254, 16 [#allocation3]
        %v362 = vld [vmem:[%s361] sm:$0xff]
        %v363 = vsub.f32 %v360, %v362
        %v364 = vand.u32 2147483647, %v363
        %vm365 = vcmp.lt.f32.partialorder %v364, 1.0
        %v366 = vmul.f32 %v363, 0.5
        %v367 = vmul.f32 %v366, %v363
        %v368 = vsub.f32 %v364, 0.5
        %v369 = vsel %vm365, %v367, %v368
        %v370 = vmul.f32 %v294, %v369
        %v371 = vrot.slane %v370, 4
        %v372 = vadd.f32 %v370, %v371
        %v373 = vrot.slane %v372, 2
        %v374 = vadd.f32 %v372, %v373
        %v375 = vrot.slane %v374, 1
        %v376 = vadd.f32 %v374, %v375
        %s377 = scalar_lea.vmem %s247, 24 [#allocation2]
        %v378 = vld [vmem:[%s377] sm:$0xff]
        %s379 = scalar_lea.vmem %s254, 24 [#allocation3]
        %v380 = vld [vmem:[%s379] sm:$0xff]
        %v381 = vsub.f32 %v378, %v380
        %v382 = vand.u32 2147483647, %v381
        %vm383 = vcmp.lt.f32.partialorder %v382, 1.0
        %v384 = vmul.f32 %v381, 0.5
        %v385 = vmul.f32 %v384, %v381
        %v386 = vsub.f32 %v382, 0.5
        %v387 = vsel %vm383, %v385, %v386
        %v388 = vmul.f32 %v294, %v387
        %v389 = vrot.slane %v388, 4
        %v390 = vadd.f32 %v388, %v389
        %v391 = vrot.slane %v390, 2
        %v392 = vadd.f32 %v390, %v391
        %v393 = vrot.slane %v392, 1
        %v394 = vadd.f32 %v392, %v393
        %s395 = scalar_lea.vmem %s247, 32 [#allocation2]
        %v396 = vld [vmem:[%s395] sm:$0xff]
        %s397 = scalar_lea.vmem %s254, 32 [#allocation3]
        %v398 = vld [vmem:[%s397] sm:$0xff]
        %v399 = vsub.f32 %v396, %v398
        %v400 = vand.u32 2147483647, %v399
        %vm401 = vcmp.lt.f32.partialorder %v400, 1.0
        %v402 = vmul.f32 %v399, 0.5
        %v403 = vmul.f32 %v402, %v399
        %v404 = vsub.f32 %v400, 0.5
        %v405 = vsel %vm401, %v403, %v404
        %v406 = vmul.f32 %v294, %v405
        %v407 = vrot.slane %v406, 4
        %v408 = vadd.f32 %v406, %v407
        %v409 = vrot.slane %v408, 2
        %v410 = vadd.f32 %v408, %v409
        %v411 = vrot.slane %v410, 1
        %v412 = vadd.f32 %v410, %v411
        %v413 = vrot.slane %v294, 4
        %v414 = vadd.f32 %v294, %v413
        %v415 = vrot.slane %v414, 2
        %v416 = vadd.f32 %v414, %v415
        %v417 = vrot.slane %v416, 1
        %v418 = vadd.f32 %v416, %v417
        %v419 = vrot.slane %v297, 4
        %v420 = vadd.f32 %v297, %v419
        %v421 = vrot.slane %v420, 2
        %v422 = vadd.f32 %v420, %v421
        %v423 = vrot.slane %v422, 1
        %v424 = vadd.f32 %v422, %v423
        %vm425 = vcmp.ge.f32.partialorder %v303, 0.7
        %v426 = vsel %vm425, 1, 0
        %v427 = vcvt.s32.f32 %v426
        %v428 = vmul.f32 %v294, %v427
        %v429 = vrot.slane %v428, 4
        %v430 = vadd.f32 %v428, %v429
        %v431 = vrot.slane %v430, 2
        %v432 = vadd.f32 %v430, %v431
        %v433 = vrot.slane %v432, 1
        %v434 = vadd.f32 %v432, %v433
        %vm435 = vcmp.lt.f32.partialorder %v303, 0.3
        %v436 = vsel %vm435, 1, 0
        %v437 = vcvt.s32.f32 %v436
        %v438 = vmul.f32 %v297, %v437
        %v439 = vrot.slane %v438, 4
        %v440 = vadd.f32 %v438, %v439
        %v441 = vrot.slane %v440, 2
        %v442 = vadd.f32 %v440, %v441
        %v443 = vrot.slane %v442, 1
        %v444 = vadd.f32 %v442, %v443
        %v445 = vlaneseq
        %v446 = vshrl.u32 %v445, 7
        %v447 = vadd.s32 %v446, 8
        %vm448 = vcmp.eq.s32.totalorder %v446, 0
        %vm449 = vcmp.eq.s32.totalorder %v447, 0
        %v450 = vsel %vm448, %v328, 0.0
        %v451 = vsel %vm449, %v328, 0.0
        %v452 = vadd.f32 %v450, 0.0
        %v453 = vadd.f32 %v451, 0.0
        %vm454 = vcmp.eq.s32.totalorder %v446, 1
        %vm455 = vcmp.eq.s32.totalorder %v447, 1
        %v456 = vsel %vm454, %v334, 0.0
        %v457 = vsel %vm455, %v334, 0.0
        %v458 = vadd.f32 %v452, %v456
        %v459 = vadd.f32 %v453, %v457
        %vm460 = vcmp.eq.s32.totalorder %v446, 2
        %vm461 = vcmp.eq.s32.totalorder %v447, 2
        %v462 = vsel %vm460, %v340, 0.0
        %v463 = vsel %vm461, %v340, 0.0
        %v464 = vadd.f32 %v458, %v462
        %v465 = vadd.f32 %v459, %v463
        %vm466 = vcmp.eq.s32.totalorder %v446, 3
        %vm467 = vcmp.eq.s32.totalorder %v447, 3
        %v468 = vsel %vm466, %v358, 0.0
        %v469 = vsel %vm467, %v358, 0.0
        %v470 = vadd.f32 %v464, %v468
        %v471 = vadd.f32 %v465, %v469
        %vm472 = vcmp.eq.s32.totalorder %v446, 4
        %vm473 = vcmp.eq.s32.totalorder %v447, 4
        %v474 = vsel %vm472, %v376, 0.0
        %v475 = vsel %vm473, %v376, 0.0
        %v476 = vadd.f32 %v470, %v474
        %v477 = vadd.f32 %v471, %v475
        %vm478 = vcmp.eq.s32.totalorder %v446, 5
        %vm479 = vcmp.eq.s32.totalorder %v447, 5
        %v480 = vsel %vm478, %v394, 0.0
        %v481 = vsel %vm479, %v394, 0.0
        %v482 = vadd.f32 %v476, %v480
        %v483 = vadd.f32 %v477, %v481
        %vm484 = vcmp.eq.s32.totalorder %v446, 6
        %vm485 = vcmp.eq.s32.totalorder %v447, 6
        %v486 = vsel %vm484, %v412, 0.0
        %v487 = vsel %vm485, %v412, 0.0
        %v488 = vadd.f32 %v482, %v486
        %v489 = vadd.f32 %v483, %v487
        %vm490 = vcmp.eq.s32.totalorder %v446, 7
        %vm491 = vcmp.eq.s32.totalorder %v447, 7
        %v492 = vsel %vm490, %v418, 0.0
        %v493 = vsel %vm491, %v418, 0.0
        %v494 = vadd.f32 %v488, %v492
        %v495 = vadd.f32 %v489, %v493
        %vm496 = vcmp.eq.s32.totalorder %v446, 8
        %vm497 = vcmp.eq.s32.totalorder %v447, 8
        %v498 = vsel %vm496, %v424, 0.0
        %v499 = vsel %vm497, %v424, 0.0
        %v500 = vadd.f32 %v494, %v498
        %v501 = vadd.f32 %v495, %v499
        %vm502 = vcmp.eq.s32.totalorder %v446, 9
        %vm503 = vcmp.eq.s32.totalorder %v447, 9
        %v504 = vsel %vm502, %v434, 0.0
        %v505 = vsel %vm503, %v434, 0.0
        %v506 = vadd.f32 %v500, %v504
        %v507 = vadd.f32 %v501, %v505
        %vm508 = vcmp.eq.s32.totalorder %v446, 10
        %vm509 = vcmp.eq.s32.totalorder %v447, 10
        %v510 = vsel %vm508, %v444, 0.0
        %v511 = vsel %vm509, %v444, 0.0
        %v512 = vadd.f32 %v506, %v510
        %v513 = vadd.f32 %v507, %v511
        %v514 = vld [vmem:[%s283] sm:$0xff]
        %v515 = vld [vmem:[%s283 + $0x8] sm:$0xff]
        %v516 = vadd.f32 %v514, %v512
        %v517 = vadd.f32 %v515, %v513
        %518 = vst [vmem:[%s283] sm:$0xff] %v516
        %519 = vst [vmem:[%s283 + $0x8] sm:$0xff] %v517
        %p520 = scmp.lt.s32.totalorder %s17, 1
        %s521 = scalar_select %p520, %s17, 1
        %s522 = smul.addr %s521, 2
        %s523 = smul.addr %s522, 8
        %s524 = scalar_lea.vmem %s2, %s523
        // Predicated region
        $region109: #{focal_loss_forward.1} parent=95 // pred_check
          %p525 = pneg %p99
        $region110: #{focal_loss_forward.1} parent=95 // pred_check_branch
          %527 = sbr.rel (%p525) target = $region112
        $region111: #{focal_loss_forward.1} parent=95 // pred_region
          _
        $region112: #{focal_loss_forward.1} parent=95 // pred_fallthru
          _
      $region96: #{focal_loss_forward.1} parent=5 // pred_fallthru
        _
      %p528 = scmp.le.s32.totalorder 2, %s8
      // Predicated region
      $region113: #{focal_loss_forward.1} parent=5 // pred_check
        %p529 = pneg %p528
      $region114: #{focal_loss_forward.1} parent=5 // pred_check_branch
        %531 = sbr.rel (%p529) target = $region116
      $region115: #{focal_loss_forward.1} parent=5 // pred_region
        %s532 = ssub.s32 %s8, 2
        // Predicated region
        $region117: #{focal_loss_forward.1} parent=115 // pred_check
          %p533 = pneg %p105
        $region118: #{focal_loss_forward.1} parent=115 // pred_check_branch
          %535 = sbr.rel (%p533) target = $region120
        $region119: #{focal_loss_forward.1} parent=115 // pred_region
          %p536 = scmp.lt.s32.totalorder %s19, 1
          %s537 = scalar_select %p536, %s19, 1
          %s538 = smul.addr %s537, 2
          %s539 = smul.addr %s538, 8
          %s540 = scalar_lea.vmem %s2, %s539
        $region120: #{focal_loss_forward.1} parent=115 // pred_fallthru
          _
      $region116: #{focal_loss_forward.1} parent=5 // pred_fallthru
        _
    $region6: #{focal_loss_forward.1} parent=1 // loop_footer
      %s12 = sadd.s32 1, %s8
    $region7: #{focal_loss_forward.1} parent=1 // loop_footer_branch
      %7 = sbr.rel target = $region3
    $region8: #{focal_loss_forward.1} parent=1 // loop_exit
      _

</llo_original>
